<compile_context>
chip_gen: v7x
topology: tpu7x:2x2x1
jax: 0.10.0
libtpu: 0.0.40
codegen_flags: <defaults>
</compile_context>

<pallas_src>
import functools

import jax
import jax.numpy as jnp
from jax.experimental import pallas as pl
from jax.experimental.pallas import tpu as pltpu

IGNORE_INDEX = -100
_NEG_BIG = -1e30            # finite "minus infinity" init (avoids inf-inf NaN)
_MASK_VALUE = float("-inf")  # fill for padded vocab columns


def _round_up(x, m):
    return ((x + m - 1) // m) * m


def _chip_info():
    """(vmem_capacity_bytes, two_tensorcores_heuristic)."""
    try:
        vmem = int(pltpu.get_tpu_info().vmem_capacity_bytes)
    except Exception:
        vmem = 64 * 1024 * 1024
    # >=100 MiB VMEM => v5e/v6e (single TC, big VMEM); otherwise assume v7x-like
    # (two TCs, 64 MiB VMEM) which is also the conservative fallback.
    return vmem, vmem < 100 * 1024 * 1024


def _tile_need_bytes(tm, tv, h, x_itemsize, w_itemsize):
    return (2 * h * (tm * x_itemsize + tv * w_itemsize)   # double-buffered x / w tiles
            + 3 * tm * tv * 4                             # f32 logits / exp temporaries
            + 4 * tm * 128 * 4)                           # lane-dense scratch + slack


def _vmem_limit_bytes(tm, tv, h, x_itemsize, w_itemsize):
    vmem_cap, _ = _chip_info()
    need = _tile_need_bytes(tm, tv, h, x_itemsize, w_itemsize) + (4 << 20)
    cap = int(vmem_cap * 3 // 4)
    return int(min(cap, max(32 * 1024 * 1024, need)))


def _choose_tv(v, h, itemsize):
    """Vocab tile: widest of {1024,512,256,128} with <=3% padding waste that fits VMEM."""
    vmem_cap, two_core = _chip_info()
    budget = vmem_cap * 3 // 4 - (4 << 20)
    tm_assumed = 512 if two_core else 1024
    v_pad128 = _round_up(v, 128)
    tv = 128
    for cand in (1024, 512, 256, 128):
        waste = _round_up(v_pad128, cand) - v_pad128
        if waste <= 0.03 * v_pad128:
            tv = cand
            break
    while tv > 128 and _tile_need_bytes(tm_assumed, tv, h, itemsize, itemsize) > budget:
        tv //= 2
    return tv


def _choose_tm(bt, tv, h, x_itemsize, w_itemsize):
    """Row tile: as tall as VMEM allows on single-TC chips (weight reuse ~ tm
    FLOPs per weight byte); >=2 row tiles and <=512 rows on two-TC chips."""
    vmem_cap, two_core = _chip_info()
    budget = vmem_cap * 3 // 4 - (4 << 20)
    bt8 = _round_up(bt, 8)
    cap = 512 if two_core else 1024
    min_tiles = 2 if (two_core and bt8 > 8) else 1
    n_tiles = max(min_tiles, -(-bt8 // cap))
    tm = _round_up(-(-bt8 // n_tiles), 8)
    while tm > 8 and _tile_need_bytes(tm, tv, h, x_itemsize, w_itemsize) > budget:
        tm = max(8, _round_up(tm // 2, 8))
    return tm


# ---------------------------------------------------------------------------
# Fused linear + cross-entropy kernel (lane-dense online logsumexp over vocab)
# ---------------------------------------------------------------------------
def _flce_kernel(x_ref, w_ref, t_ref, loss_ref, m_sc, l_sc, tgt_sc,
                 *, tv, v_actual, v_padded, ignore_index):
    vi = pl.program_id(1)
    last = pl.num_programs(1) - 1
    tm = t_ref.shape[0]
    n_groups = tv // 128

    @pl.when(vi == 0)
    def _():
        m_sc[...] = jnp.full(m_sc.shape, _NEG_BIG, dtype=m_sc.dtype)
        l_sc[...] = jnp.zeros(l_sc.shape, dtype=l_sc.dtype)
        tgt_sc[...] = jnp.zeros(tgt_sc.shape, dtype=tgt_sc.dtype)

    # (tm, H) x (H, tv) -> (tm, tv): weight is pre-transposed, no in-kernel transpose.
    logits = jax.lax.dot_general(
        x_ref[...], w_ref[...],
        dimension_numbers=(((1,), (0,)), ((), ())),
        preferred_element_type=jnp.float32)

    # Loop-invariant lane iota, reused for target gather and last-tile masking.
    lane = jax.lax.broadcasted_iota(jnp.int32, (tm, 128), 1)
    tgt_rel = t_ref[...] - vi * tv                     # (tm, 1) int32

    def update(mask_pad):
        groups = [logits[:, g * 128:(g + 1) * 128] for g in range(n_groups)]
        if mask_pad:
            vlim = v_actual - vi * tv                  # valid columns in this tile
            groups = [jnp.where(lane < (vlim - g * 128), lg, _MASK_VALUE)
                      for g, lg in enumerate(groups)]
        # Per-lane running max (pure VPU folds over the lane groups).
        m_old = m_sc[...]
        m_new = m_old
        for lg in groups:
            m_new = jnp.maximum(m_new, lg)
        # Per-lane running sum-exp + target-logit partials.
        l_new = l_sc[...] * jnp.exp(m_old - m_new)
        t_new = tgt_sc[...]
        for g, lg in enumerate(groups):
            l_new = l_new + jnp.exp(lg - m_new)
            t_new = t_new + jnp.where(lane == (tgt_rel - g * 128), lg, 0.0)
        m_sc[...] = m_new
        l_sc[...] = l_new
        tgt_sc[...] = t_new

    if v_padded == v_actual:
        # No padded vocab columns at all (trace-time decision): no masking work.
        update(False)
    else:
        # Padding only exists in the final vocab tile -> gate the mask there.
        @pl.when(vi != last)
        def _():
            update(False)

        @pl.when(vi == last)
        def _():
            update(True)

    @pl.when(vi == last)
    def _():
        # Single cross-lane (XLU) reduce + combine, once per row tile.
        m_lane = m_sc[...]
        m_row = m_lane.max(axis=-1, keepdims=True)
        l_row = (l_sc[...] * jnp.exp(m_lane - m_row)).sum(axis=-1, keepdims=True)
        lse = m_row + jnp.log(l_row)
        tgt = tgt_sc[...].sum(axis=-1, keepdims=True)
        valid = t_ref[...] != ignore_index
        loss_ref[...] = jnp.where(valid, lse - tgt, 0.0)


def _flce_pallas(x2d, target_1d, w_t, v_actual, tv, ignore_index=IGNORE_INDEX):
    """Per-row (unnormalized) CE losses, shape (bt_pad, 1) f32.  w_t is the
    padded, pre-transposed (H, v_pad) weight."""
    bt, h = x2d.shape
    hw, v_pad = w_t.shape
    assert hw == h and v_pad % tv == 0

    # Cast x (cheap, BT*H) to the weight dtype so the MXU sees matched operands;
    # the weight itself streams in its native (e.g. bf16) dtype.
    if x2d.dtype != w_t.dtype:
        x2d = x2d.astype(w_t.dtype)
    x_itemsize = jnp.dtype(x2d.dtype).itemsize
    w_itemsize = jnp.dtype(w_t.dtype).itemsize

    tm = _choose_tm(bt, tv, h, x_itemsize, w_itemsize)
    bt_pad = _round_up(bt, tm)
    target = target_1d.astype(jnp.int32)
    if bt_pad != bt:
        x2d = jnp.pad(x2d, ((0, bt_pad - bt), (0, 0)))
        target = jnp.pad(target, (0, bt_pad - bt), constant_values=ignore_index)
    target = target.reshape(bt_pad, 1)

    grid = (bt_pad // tm, v_pad // tv)
    kernel = functools.partial(_flce_kernel, tv=tv, v_actual=v_actual,
                               v_padded=v_pad, ignore_index=ignore_index)
    cost = pl.CostEstimate(
        flops=2 * bt_pad * h * v_pad,
        transcendentals=bt_pad * v_pad + bt_pad * 128 * grid[1],
        bytes_accessed=(bt_pad * h * x_itemsize
                        + grid[0] * v_pad * h * w_itemsize
                        + bt_pad * 8))

    loss_2d = pl.pallas_call(
        kernel,
        out_shape=jax.ShapeDtypeStruct((bt_pad, 1), jnp.float32),
        grid_spec=pltpu.PrefetchScalarGridSpec(
            num_scalar_prefetch=0,
            grid=grid,
            in_specs=[
                pl.BlockSpec((tm, h), lambda i, j: (i, 0)),
                pl.BlockSpec((h, tv), lambda i, j: (0, j)),
                pl.BlockSpec((tm, 1), lambda i, j: (i, 0)),
            ],
            out_specs=pl.BlockSpec((tm, 1), lambda i, j: (i, 0)),
            scratch_shapes=[
                pltpu.VMEM((tm, 128), jnp.float32),  # per-lane running max
                pltpu.VMEM((tm, 128), jnp.float32),  # per-lane running sum-exp
                pltpu.VMEM((tm, 128), jnp.float32),  # per-lane target-logit partials
            ],
        ),
        compiler_params=pltpu.CompilerParams(
            dimension_semantics=("parallel", "arbitrary"),
            vmem_limit_bytes=_vmem_limit_bytes(tm, tv, h, x_itemsize, w_itemsize)),
        cost_estimate=cost,
    )(x2d, w_t, target)
    return loss_2d


def fused_linear_cross_entropy(hidden_states, weight, labels, ignore_index=IGNORE_INDEX):
    """Standalone functional API (pads/transposes the weight per call; the
    module wrapper below hoists that into __init__)."""
    x = hidden_states
    if x.ndim == 3:
        x = x.reshape(-1, x.shape[-1])
    v, h = weight.shape
    tv = _choose_tv(v, h, jnp.dtype(weight.dtype).itemsize)
    v_pad = _round_up(_round_up(v, 128), tv)
    w = weight if v_pad == v else jnp.pad(weight, ((0, v_pad - v), (0, 0)))
    loss_2d = _flce_pallas(x, labels.reshape(-1), w.T, v, tv, ignore_index)
    n = jnp.sum(labels.reshape(-1) != ignore_index).astype(jnp.float32)
    return jnp.sum(loss_2d) / jnp.maximum(n, 1.0)


# ---------------------------------------------------------------------------
# Plain linear kernel (labels is None path -> return logits)
# ---------------------------------------------------------------------------
def _linear_kernel(x_ref, w_ref, o_ref):
    o_ref[...] = jax.lax.dot_general(
        x_ref[...], w_ref[...],
        dimension_numbers=(((1,), (0,)), ((), ())),
        preferred_element_type=jnp.float32).astype(o_ref.dtype)


def _linear_pallas(x2d, w_t, v_actual, tv, out_dtype):
    bt, h = x2d.shape
    v_pad = w_t.shape[1]
    if x2d.dtype != w_t.dtype:
        x2d = x2d.astype(w_t.dtype)
    x_itemsize = jnp.dtype(x2d.dtype).itemsize
    w_itemsize = jnp.dtype(w_t.dtype).itemsize
    tm = _choose_tm(bt, tv, h, x_itemsize, w_itemsize)
    bt_pad = _round_up(bt, tm)
    if bt_pad != bt:
        x2d = jnp.pad(x2d, ((0, bt_pad - bt), (0, 0)))
    grid = (bt_pad // tm, v_pad // tv)
    cost = pl.CostEstimate(
        flops=2 * bt_pad * h * v_pad,
        transcendentals=0,
        bytes_accessed=(bt_pad * h * x_itemsize
                        + grid[0] * v_pad * h * w_itemsize
                        + bt_pad * v_pad * jnp.dtype(out_dtype).itemsize))

    logits = pl.pallas_call(
        _linear_kernel,
        out_shape=jax.ShapeDtypeStruct((bt_pad, v_pad), out_dtype),
        grid_spec=pltpu.PrefetchScalarGridSpec(
            num_scalar_prefetch=0,
            grid=grid,
            in_specs=[
                pl.BlockSpec((tm, h), lambda i, j: (i, 0)),
                pl.BlockSpec((h, tv), lambda i, j: (0, j)),
            ],
            out_specs=pl.BlockSpec((tm, tv), lambda i, j: (i, j)),
        ),
        compiler_params=pltpu.CompilerParams(
            dimension_semantics=("parallel", "parallel"),
            vmem_limit_bytes=_vmem_limit_bytes(tm, tv, h, x_itemsize, w_itemsize)),
        cost_estimate=cost,
    )(x2d, w_t)
    return logits[:bt, :v_actual]


# ---------------------------------------------------------------------------
# Module-equivalent wrapper
# ---------------------------------------------------------------------------
class LigerFusedLinearCrossEntropy:
    """Forward-pass-only analogue of the PyTorch module (defaults: bias=False,
    ce_weight=None, ignore_index=-100, label_smoothing=0, lse_square_scale=0,
    reduction='mean', softcap=None, return_z_loss=False)."""

    def __init__(self, vocab_size, hidden_size, bias=False, key=None,
                 param_dtype=jnp.bfloat16):
        key = jax.random.PRNGKey(0) if key is None else key
        self.vocab_size = vocab_size
        self.hidden_size = hidden_size
        # Deterministic synthetic init (the PyTorch module uses torch.empty).
        self.weight = (0.02 * jax.random.normal(
            key, (vocab_size, hidden_size), dtype=jnp.float32)).astype(param_dtype)
        self.bias = None
        # TODO(synk): bias=True path (adding bias to logits) not wired into the
        # Pallas kernels; the module's default is bias=False.

        # Hoist vocab padding + transpose (and native dtype) out of the
        # per-call path: done ONCE.
        self._tv = _choose_tv(vocab_size, hidden_size,
                              jnp.dtype(param_dtype).itemsize)
        v_pad = _round_up(_round_up(vocab_size, 128), self._tv)
        w = (self.weight if v_pad == vocab_size
             else jnp.pad(self.weight, ((0, v_pad - vocab_size), (0, 0))))
        self._w_t = jnp.asarray(w.T)          # (H, v_pad), materialized once

    def __call__(self, hidden_states, labels=None):
        x = hidden_states
        orig_shape = x.shape
        if x.ndim == 3:
            x = x.reshape(-1, x.shape[-1])
        if labels is None:
            out_dtype = jnp.result_type(hidden_states.dtype, self.weight.dtype)
            logits = _linear_pallas(x, self._w_t, self.vocab_size, self._tv,
                                    out_dtype)
            if len(orig_shape) == 3:
                logits = logits.reshape(orig_shape[0], orig_shape[1], self.vocab_size)
            return None, logits
        loss_2d = _flce_pallas(x, labels.reshape(-1), self._w_t,
                               self.vocab_size, self._tv)
        n = jnp.sum(labels.reshape(-1) != IGNORE_INDEX).astype(jnp.float32)
        loss = jnp.sum(loss_2d) / jnp.maximum(n, 1.0)
        return loss, None


# ---------------------------------------------------------------------------
# Demo / self-check
# ---------------------------------------------------------------------------
def _reference_loss(x, w, labels, ignore_index=IGNORE_INDEX):
    xf = x.reshape(-1, x.shape[-1]).astype(jnp.float32)
    wf = w.astype(jnp.float32)
    t = labels.reshape(-1)
    logits = xf @ wf.T
    lse = jax.nn.logsumexp(logits, axis=-1)
    safe_t = jnp.where(t == ignore_index, 0, t)
    tgt = jnp.take_along_axis(logits, safe_t[:, None], axis=-1)[:, 0]
    per_row = jnp.where(t == ignore_index, 0.0, lse - tgt)
    n = jnp.sum(t != ignore_index).astype(jnp.float32)
    return jnp.sum(per_row) / jnp.maximum(n, 1.0)


if __name__ == "__main__":
    B, T, H, V = 2, 8, 32, 256
    key = jax.random.PRNGKey(0)
    k_w, k_x, k_t, k_w2, k_w3 = jax.random.split(key, 5)

    # --- strict f32 check (loss path + logits path), single vocab tile ---
    mod = LigerFusedLinearCrossEntropy(V, H, key=k_w, param_dtype=jnp.float32)
    x = jax.random.normal(k_x, (B, T, H), dtype=jnp.float32)
    labels = jax.random.randint(k_t, (B, T), 0, V, dtype=jnp.int32)
    labels = labels.at[0, 0].set(IGNORE_INDEX).at[1, 3].set(IGNORE_INDEX)

    loss, none_logits = mod(x, labels)
    loss = jax.block_until_ready(loss)
    assert none_logits is None
    ref = _reference_loss(x, mod.weight, labels)
    assert jnp.allclose(loss, ref, rtol=1e-5, atol=1e-5), (loss, ref)

    none_loss, logits = mod(x, labels=None)
    logits = jax.block_until_ready(logits)
    assert none_loss is None and logits.shape == (B, T, V)
    ref_logits = (x.reshape(-1, H) @ mod.weight.T).reshape(B, T, V)
    assert jnp.allclose(logits, ref_logits, rtol=1e-5, atol=1e-5)

    # --- bf16 weights (native-dtype streaming), odd vocab (last-tile masking),
    #     odd seq length (row padding / ignore_index padded rows) ---
    V2, T2 = 250, 7
    mod2 = LigerFusedLinearCrossEntropy(V2, H, key=k_w2, param_dtype=jnp.bfloat16)
    x2 = jax.random.normal(k_x, (B, T2, H), dtype=jnp.bfloat16)
    labels2 = jax.random.randint(k_t, (B, T2), 0, V2, dtype=jnp.int32)
    labels2 = labels2.at[0, 1].set(IGNORE_INDEX)
    loss2, _ = mod2(x2, labels2)
    loss2 = jax.block_until_ready(loss2)
    ref2 = _reference_loss(x2, mod2.weight, labels2)
    assert jnp.allclose(loss2, ref2, rtol=2e-2, atol=2e-2), (loss2, ref2)

    # --- f32, multi vocab tile + multi lane-group + last-tile masking,
    #     via the functional API (V3=760 -> v_pad=768, tv=256 -> 3 tiles) ---
    V3 = 760
    w3 = 0.02 * jax.random.normal(k_w3, (V3, H), dtype=jnp.float32)
    labels3 = jax.random.randint(k_t, (B, T), 0, V3, dtype=jnp.int32)
    labels3 = labels3.at[1, 0].set(IGNORE_INDEX)
    loss3 = jax.block_until_ready(fused_linear_cross_entropy(x, w3, labels3))
    ref3 = _reference_loss(x, w3, labels3)
    assert jnp.allclose(loss3, ref3, rtol=1e-4, atol=1e-4), (loss3, ref3)

    print("KERNEL_OK")
</pallas_src>

<mosaic_0001>
module attributes {stable_mosaic.version = 11 : i64} {
  func.func @_flce_kernel(%arg0: i32, %arg1: i32, %arg2: memref<8x32xf32, #tpu.memory_space<vmem>>, %arg3: memref<32x256xf32, #tpu.memory_space<vmem>>, %arg4: memref<8x1xi32, #tpu.memory_space<vmem>>, %arg5: memref<8x1xf32, #tpu.memory_space<vmem>>, %arg6: memref<8x128xf32, #tpu.memory_space<vmem>>, %arg7: memref<8x128xf32, #tpu.memory_space<vmem>>, %arg8: memref<8x128xf32, #tpu.memory_space<vmem>>) attributes {dimension_semantics = [#tpu.dimension_semantics<parallel>, #tpu.dimension_semantics<arbitrary>], iteration_bounds = array<i64: 2, 1>, scalar_prefetch = 0 : i64, scratch_operands = 3 : i64, tpu.core_type = #tpu.core_type<tc>, window_params = [{transform_indices = @transform_0, window_bounds = array<i64: 8, 32>}, {transform_indices = @transform_1, window_bounds = array<i64: 32, 256>}, {transform_indices = @transform_2, window_bounds = array<i64: 8, 1>}, {transform_indices = @transform_3, window_bounds = array<i64: 8, 1>}]} {
    %c0_i32 = arith.constant 0 : i32
    %0 = arith.cmpi eq, %arg1, %c0_i32 : i32
    %1 = arith.extui %0 : i1 to i32
    %c0_i32_0 = arith.constant 0 : i32
    %2 = arith.cmpi ne, %1, %c0_i32_0 : i32
    scf.if %2 {
      %cst_23 = arith.constant -1.000000e+30 : f32
      %47 = vector.broadcast %cst_23 : f32 to vector<8x128xf32>
      %c0_24 = arith.constant 0 : index
      %c0_25 = arith.constant 0 : index
      %48 = vector.load %arg6[%c0_24, %c0_25] : memref<8x128xf32, #tpu.memory_space<vmem>>, vector<8x128xf32>
      tpu.vector_store %arg6[%c0_24, %c0_25], %47 {strides = array<i32>} : memref<8x128xf32, #tpu.memory_space<vmem>>, vector<8x128xf32>,
      %cst_26 = arith.constant 0.000000e+00 : f32
      %49 = vector.broadcast %cst_26 : f32 to vector<8x128xf32>
      %c0_27 = arith.constant 0 : index
      %c0_28 = arith.constant 0 : index
      %50 = vector.load %arg7[%c0_27, %c0_28] : memref<8x128xf32, #tpu.memory_space<vmem>>, vector<8x128xf32>
      tpu.vector_store %arg7[%c0_27, %c0_28], %49 {strides = array<i32>} : memref<8x128xf32, #tpu.memory_space<vmem>>, vector<8x128xf32>,
      %cst_29 = arith.constant 0.000000e+00 : f32
      %51 = vector.broadcast %cst_29 : f32 to vector<8x128xf32>
      %c0_30 = arith.constant 0 : index
      %c0_31 = arith.constant 0 : index
      %52 = vector.load %arg8[%c0_30, %c0_31] : memref<8x128xf32, #tpu.memory_space<vmem>>, vector<8x128xf32>
      tpu.vector_store %arg8[%c0_30, %c0_31], %51 {strides = array<i32>} : memref<8x128xf32, #tpu.memory_space<vmem>>, vector<8x128xf32>,
    } else {
    }
    %c0 = arith.constant 0 : index
    %c0_1 = arith.constant 0 : index
    %3 = vector.load %arg2[%c0, %c0_1] : memref<8x32xf32, #tpu.memory_space<vmem>>, vector<8x32xf32>
    %c0_2 = arith.constant 0 : index
    %c0_3 = arith.constant 0 : index
    %4 = vector.load %arg3[%c0_2, %c0_3] : memref<32x256xf32, #tpu.memory_space<vmem>>, vector<32x256xf32>
    %cst = arith.constant dense<0.000000e+00> : vector<8x256xf32>
    %5 = tpu.matmul %3, %4, %cst {dimension_numbers = #tpu.dot_dimension_numbers<[1], [0], [0], [1], [0, 0, 1, 1], [], []>} : vector<8x32xf32>, vector<32x256xf32>, vector<8x256xf32> -> vector<8x256xf32>
    %6 = tpu.iota {dimensions = array<i32: 1>} : vector<8x128xi32>
    %c0_4 = arith.constant 0 : index
    %c0_5 = arith.constant 0 : index
    %7 = vector.load %arg4[%c0_4, %c0_5] : memref<8x1xi32, #tpu.memory_space<vmem>>, vector<8x1xi32>
    %c256_i32 = arith.constant 256 : i32
    %8 = arith.muli %arg1, %c256_i32 : i32
    %9 = vector.broadcast %8 : i32 to vector<8x1xi32>
    %10 = arith.subi %7, %9 : vector<8x1xi32>
    %11 = vector.extract_strided_slice %5 {offsets = [0, 0], sizes = [8, 128], strides = [1, 1]} : vector<8x256xf32> to vector<8x128xf32>
    %12 = vector.extract_strided_slice %5 {offsets = [0, 128], sizes = [8, 128], strides = [1, 1]} : vector<8x256xf32> to vector<8x128xf32>
    %c0_6 = arith.constant 0 : index
    %c0_7 = arith.constant 0 : index
    %13 = vector.load %arg6[%c0_6, %c0_7] : memref<8x128xf32, #tpu.memory_space<vmem>>, vector<8x128xf32>
    %14 = arith.maximumf %13, %11 : vector<8x128xf32>
    %15 = arith.maximumf %14, %12 : vector<8x128xf32>
    %c0_8 = arith.constant 0 : index
    %c0_9 = arith.constant 0 : index
    %16 = vector.load %arg7[%c0_8, %c0_9] : memref<8x128xf32, #tpu.memory_space<vmem>>, vector<8x128xf32>
    %17 = arith.subf %13, %15 : vector<8x128xf32>
    %18 = math.exp %17 : vector<8x128xf32>
    %19 = arith.mulf %16, %18 : vector<8x128xf32>
    %c0_10 = arith.constant 0 : index
    %c0_11 = arith.constant 0 : index
    %20 = vector.load %arg8[%c0_10, %c0_11] : memref<8x128xf32, #tpu.memory_space<vmem>>, vector<8x128xf32>
    %21 = arith.subf %11, %15 : vector<8x128xf32>
    %22 = math.exp %21 : vector<8x128xf32>
    %23 = arith.addf %19, %22 : vector<8x128xf32>
    %c0_i32_12 = arith.constant 0 : i32
    %24 = vector.broadcast %c0_i32_12 : i32 to vector<8x1xi32>
    %25 = arith.subi %10, %24 : vector<8x1xi32>
    %26 = vector.broadcast %25 : vector<8x1xi32> to vector<8x128xi32>
    %27 = arith.cmpi eq, %6, %26 : vector<8x128xi32>
    %cst_13 = arith.constant 0.000000e+00 : f32
    %28 = vector.broadcast %cst_13 : f32 to vector<8x128xf32>
    %29 = arith.select %27, %11, %28 : vector<8x128xi1>, vector<8x128xf32>
    %30 = arith.addf %20, %29 : vector<8x128xf32>
    %31 = arith.subf %12, %15 : vector<8x128xf32>
    %32 = math.exp %31 : vector<8x128xf32>
    %33 = arith.addf %23, %32 : vector<8x128xf32>
    %c128_i32 = arith.constant 128 : i32
    %34 = vector.broadcast %c128_i32 : i32 to vector<8x1xi32>
    %35 = arith.subi %10, %34 : vector<8x1xi32>
    %36 = vector.broadcast %35 : vector<8x1xi32> to vector<8x128xi32>
    %37 = arith.cmpi eq, %6, %36 : vector<8x128xi32>
    %cst_14 = arith.constant 0.000000e+00 : f32
    %38 = vector.broadcast %cst_14 : f32 to vector<8x128xf32>
    %39 = arith.select %37, %12, %38 : vector<8x128xi1>, vector<8x128xf32>
    %40 = arith.addf %30, %39 : vector<8x128xf32>
    %c0_15 = arith.constant 0 : index
    %c0_16 = arith.constant 0 : index
    %41 = vector.load %arg6[%c0_15, %c0_16] : memref<8x128xf32, #tpu.memory_space<vmem>>, vector<8x128xf32>
    tpu.vector_store %arg6[%c0_15, %c0_16], %15 {strides = array<i32>} : memref<8x128xf32, #tpu.memory_space<vmem>>, vector<8x128xf32>,
    %c0_17 = arith.constant 0 : index
    %c0_18 = arith.constant 0 : index
    %42 = vector.load %arg7[%c0_17, %c0_18] : memref<8x128xf32, #tpu.memory_space<vmem>>, vector<8x128xf32>
    tpu.vector_store %arg7[%c0_17, %c0_18], %33 {strides = array<i32>} : memref<8x128xf32, #tpu.memory_space<vmem>>, vector<8x128xf32>,
    %c0_19 = arith.constant 0 : index
    %c0_20 = arith.constant 0 : index
    %43 = vector.load %arg8[%c0_19, %c0_20] : memref<8x128xf32, #tpu.memory_space<vmem>>, vector<8x128xf32>
    tpu.vector_store %arg8[%c0_19, %c0_20], %40 {strides = array<i32>} : memref<8x128xf32, #tpu.memory_space<vmem>>, vector<8x128xf32>,
    %c0_i32_21 = arith.constant 0 : i32
    %44 = arith.cmpi eq, %arg1, %c0_i32_21 : i32
    %45 = arith.extui %44 : i1 to i32
    %c0_i32_22 = arith.constant 0 : i32
    %46 = arith.cmpi ne, %45, %c0_i32_22 : i32
    scf.if %46 {
      %c0_23 = arith.constant 0 : index
      %c0_24 = arith.constant 0 : index
      %47 = vector.load %arg6[%c0_23, %c0_24] : memref<8x128xf32, #tpu.memory_space<vmem>>, vector<8x128xf32>
      %cst_25 = arith.constant dense<0xFF800000> : vector<8xf32>
      %48 = vector.multi_reduction <maximumf>, %47, %cst_25 [1] : vector<8x128xf32> to vector<8xf32>
      %49 = vector.shape_cast %48 : vector<8xf32> to vector<8x1xf32>
      %c0_26 = arith.constant 0 : index
      %c0_27 = arith.constant 0 : index
      %50 = vector.load %arg7[%c0_26, %c0_27] : memref<8x128xf32, #tpu.memory_space<vmem>>, vector<8x128xf32>
      %51 = vector.broadcast %49 : vector<8x1xf32> to vector<8x128xf32>
      %52 = arith.subf %47, %51 : vector<8x128xf32>
      %53 = math.exp %52 : vector<8x128xf32>
      %54 = arith.mulf %50, %53 : vector<8x128xf32>
      %cst_28 = arith.constant dense<0.000000e+00> : vector<8xf32>
      %55 = vector.multi_reduction <add>, %54, %cst_28 [1] : vector<8x128xf32> to vector<8xf32>
      %56 = vector.shape_cast %55 : vector<8xf32> to vector<8x1xf32>
      %57 = math.log %56 : vector<8x1xf32>
      %58 = arith.addf %49, %57 : vector<8x1xf32>
      %c0_29 = arith.constant 0 : index
      %c0_30 = arith.constant 0 : index
      %59 = vector.load %arg8[%c0_29, %c0_30] : memref<8x128xf32, #tpu.memory_space<vmem>>, vector<8x128xf32>
      %cst_31 = arith.constant dense<0.000000e+00> : vector<8xf32>
      %60 = vector.multi_reduction <add>, %59, %cst_31 [1] : vector<8x128xf32> to vector<8xf32>
      %61 = vector.shape_cast %60 : vector<8xf32> to vector<8x1xf32>
      %c0_32 = arith.constant 0 : index
      %c0_33 = arith.constant 0 : index
      %62 = vector.load %arg4[%c0_32, %c0_33] : memref<8x1xi32, #tpu.memory_space<vmem>>, vector<8x1xi32>
      %c-100_i32 = arith.constant -100 : i32
      %63 = vector.broadcast %c-100_i32 : i32 to vector<8x1xi32>
      %64 = arith.cmpi ne, %62, %63 : vector<8x1xi32>
      %65 = arith.subf %58, %61 : vector<8x1xf32>
      %cst_34 = arith.constant 0.000000e+00 : f32
      %66 = vector.broadcast %cst_34 : f32 to vector<8x1xf32>
      %67 = arith.select %64, %65, %66 : vector<8x1xi1>, vector<8x1xf32>
      %c0_35 = arith.constant 0 : index
      %c0_36 = arith.constant 0 : index
      %68 = vector.load %arg5[%c0_35, %c0_36] : memref<8x1xf32, #tpu.memory_space<vmem>>, vector<8x1xf32>
      tpu.vector_store %arg5[%c0_35, %c0_36], %67 {strides = array<i32>} : memref<8x1xf32, #tpu.memory_space<vmem>>, vector<8x1xf32>,
    } else {
    }
    return
  }
  func.func @transform_0(%arg0: i32, %arg1: i32) -> (i32, i32) {
    %c0_i32 = arith.constant 0 : i32
    %c0_i32_0 = arith.constant 0 : i32
    return %arg0, %c0_i32 : i32, i32
  }
  func.func @transform_1(%arg0: i32, %arg1: i32) -> (i32, i32) {
    %c0_i32 = arith.constant 0 : i32
    %c0_i32_0 = arith.constant 0 : i32
    return %c0_i32, %arg1 : i32, i32
  }
  func.func @transform_2(%arg0: i32, %arg1: i32) -> (i32, i32) {
    %c0_i32 = arith.constant 0 : i32
    %c0_i32_0 = arith.constant 0 : i32
    return %arg0, %c0_i32 : i32, i32
  }
  func.func @transform_3(%arg0: i32, %arg1: i32) -> (i32, i32) {
    %c0_i32 = arith.constant 0 : i32
    %c0_i32_0 = arith.constant 0 : i32
    return %arg0, %c0_i32 : i32, i32
  }
}

</mosaic_0001>

<llo_original>
// kernel: tpu_custom_call.1
$region0: #{tpu_custom_call.1}
  #allocation0 [shape = 'u32[]', space=smem, size = 0x4, offset = 0x4, fixed_abs, tag = 'smem constant byte address 0x4 - core index']
  #allocation1 [shape = 'u32[144,128]{1,0:T(1,128)}', space=vmem, size = 0x12000, scoped, tag = 'internal scratch']
  #allocation2 [shape = 'f32[8,128]{1,0:T(8,128)}', space=vmem, size = 0x1000, scoped, tag = 'scratch operand']
  #allocation3 [shape = 'f32[8,128]{1,0:T(8,128)}', space=vmem, size = 0x1000, scoped, tag = 'scratch operand']
  #allocation4 [shape = 'f32[8,128]{1,0:T(8,128)}', space=vmem, size = 0x1000, scoped, tag = 'scratch operand']
  %s0 = inlined_call_operand.vmem [shape: f32[16,32], index: 0, kind: input, shape index: {}]
  %s1 = inlined_call_operand.hbm [shape: f32[32,256], index: 1, kind: input, shape index: {}]
  %s2 = inlined_call_operand.vmem [shape: s32[16,1], index: 2, kind: input, shape index: {}]
  %s3 = inlined_call_operand.vmem [shape: f32[16,1], index: 3, kind: output, shape index: {}]
  %s4 = sld [smem:[#allocation0]]
  $region57: #{tpu_custom_call.1} parent=0
    _
  %s6 = ssub.s32 1, %s4
  %s7 = scalar_select 0, %s6, %s4
  $region1: #{tpu_custom_call.1} parent=0
    #allocation5 [shape = 'u8[32768]{0}', space=vmem, size = 0x8000, scoped, tag = 'input window, operand 1, single buffered']
    #allocation6 [shape = 's32[2]{0}', space=sflag, size = 0x8, scoped, tag = 'scoped memory for tpu_custom_call.1']
    %8 = vsyncpa [#allocation6], 0
    loop: start=0, step=1, limit=4
    $region2: #{tpu_custom_call.1} parent=1 // loop_pre_header
      _
    $region3: #{tpu_custom_call.1} parent=1 // loop_header
      %s10 = sphi 0, %s14
      %p11 = scmp.ge.s32.totalorder %s10, 4
      %s17 = sphi 0, %s29
      %s18 = sphi 0, %s25
      %s19 = sphi 0, %s17
      %s20 = sphi 0, %s18
      %s21 = sphi 0, %s19
      %s22 = sphi 0, %s20
      %s32 = sphi 0, %s34
      %s35 = sphi 0, %s32
      %s36 = sphi 0, %s35
      %s52 = sphi 0, %s36
      %s58 = sphi 0, %s60
      %s61 = sphi 0, %s58
      %s62 = sphi 0, %s61
      %s78 = sphi 0, %s62
      %s84 = sphi 0, %s86
      %s87 = sphi 0, %s84
      %s88 = sphi 0, %s87
      %s104 = sphi 0, %s88
      %s110 = sphi 0, %s112
      %s113 = sphi 0, %s110
      %s114 = sphi 0, %s113
      %s130 = sphi 0, %s114
    $region4: #{tpu_custom_call.1} parent=1 // loop_header_branch
      %13 = sbr.rel (%p11) target = $region8
    $region5: #{tpu_custom_call.1} parent=1 // loop_body
      %s15 = ssub.s32 %s10, 1
      %s16 = ssub.s32 %s10, 2
      %s23 = sadd.s32 1, %s18
      %p24 = scmp.ge.s32.totalorder %s23, 1
      %s25 = scalar_select %p24, 0, %s23
      %s26 = sadd.s32 1, %s17
      %s27 = scalar_select %p24, %s26, %s17
      %p28 = scmp.ge.s32.totalorder %s27, 2
      %s29 = scalar_select %p28, 0, %s27
      %s30 = ssub.s32 %s17, %s29
      %p31 = scmp.eq.s32.totalorder %s30, 0
      %s33 = sadd.s32 %s32, 1
      %s34 = scalar_select %p31, %s32, %s33
      %p37 = pneg %p31
      %p38 = scmp.eq.s32.totalorder %s10, 1
      %p39 = por %p37, %p38
      %p40 = scmp.ne.s32.totalorder %s32, %s35
      %p41 = scmp.eq.s32.totalorder %s10, 0
      %p42 = por %p40, %p41
      %p43 = scmp.ne.s32.totalorder %s32, %s35
      %p44 = scmp.eq.s32.totalorder %s15, 1
      %p45 = por %p43, %p44
      %p46 = scmp.ne.s32.totalorder %s35, %s36
      %p47 = scmp.eq.s32.totalorder %s15, 0
      %p48 = por %p46, %p47
      %p49 = scmp.ne.s32.totalorder %s35, %s36
      %p50 = scmp.eq.s32.totalorder %s16, 1
      %p51 = por %p49, %p50
      %p53 = scmp.ne.s32.totalorder %s36, %s52
      %p54 = scmp.eq.s32.totalorder %s16, 0
      %p55 = por %p53, %p54
      %s56 = ssub.s32 %s18, %s25
      %p57 = scmp.eq.s32.totalorder %s56, 0
      %s59 = sadd.s32 %s58, 1
      %s60 = scalar_select %p57, %s58, %s59
      %p63 = pneg %p57
      %p64 = scmp.eq.s32.totalorder %s10, 1
      %p65 = por %p63, %p64
      %p66 = scmp.ne.s32.totalorder %s58, %s61
      %p67 = scmp.eq.s32.totalorder %s10, 0
      %p68 = por %p66, %p67
      %p69 = scmp.ne.s32.totalorder %s58, %s61
      %p70 = scmp.eq.s32.totalorder %s15, 1
      %p71 = por %p69, %p70
      %p72 = scmp.ne.s32.totalorder %s61, %s62
      %p73 = scmp.eq.s32.totalorder %s15, 0
      %p74 = por %p72, %p73
      %p75 = scmp.ne.s32.totalorder %s61, %s62
      %p76 = scmp.eq.s32.totalorder %s16, 1
      %p77 = por %p75, %p76
      %p79 = scmp.ne.s32.totalorder %s62, %s78
      %p80 = scmp.eq.s32.totalorder %s16, 0
      %p81 = por %p79, %p80
      %s82 = ssub.s32 %s17, %s29
      %p83 = scmp.eq.s32.totalorder %s82, 0
      %s85 = sadd.s32 %s84, 1
      %s86 = scalar_select %p83, %s84, %s85
      %p89 = pneg %p83
      %p90 = scmp.eq.s32.totalorder %s10, 1
      %p91 = por %p89, %p90
      %p92 = scmp.ne.s32.totalorder %s84, %s87
      %p93 = scmp.eq.s32.totalorder %s10, 0
      %p94 = por %p92, %p93
      %p95 = scmp.ne.s32.totalorder %s84, %s87
      %p96 = scmp.eq.s32.totalorder %s15, 1
      %p97 = por %p95, %p96
      %p98 = scmp.ne.s32.totalorder %s87, %s88
      %p99 = scmp.eq.s32.totalorder %s15, 0
      %p100 = por %p98, %p99
      %p101 = scmp.ne.s32.totalorder %s87, %s88
      %p102 = scmp.eq.s32.totalorder %s16, 1
      %p103 = por %p101, %p102
      %p105 = scmp.ne.s32.totalorder %s88, %s104
      %p106 = scmp.eq.s32.totalorder %s16, 0
      %p107 = por %p105, %p106
      %s108 = ssub.s32 %s17, %s29
      %p109 = scmp.eq.s32.totalorder %s108, 0
      %s111 = sadd.s32 %s110, 1
      %s112 = scalar_select %p109, %s110, %s111
      %p115 = pneg %p109
      %p116 = scmp.eq.s32.totalorder %s10, 1
      %p117 = por %p115, %p116
      %p118 = scmp.ne.s32.totalorder %s110, %s113
      %p119 = scmp.eq.s32.totalorder %s10, 0
      %p120 = por %p118, %p119
      %p121 = scmp.ne.s32.totalorder %s110, %s113
      %p122 = scmp.eq.s32.totalorder %s15, 1
      %p123 = por %p121, %p122
      %p124 = scmp.ne.s32.totalorder %s113, %s114
      %p125 = scmp.eq.s32.totalorder %s15, 0
      %p126 = por %p124, %p125
      %p127 = scmp.ne.s32.totalorder %s113, %s114
      %p128 = scmp.eq.s32.totalorder %s16, 1
      %p129 = por %p127, %p128
      %p131 = scmp.ne.s32.totalorder %s114, %s130
      %p132 = scmp.eq.s32.totalorder %s16, 0
      %p133 = por %p131, %p132
      %p134 = scmp.le.s32.totalorder 1, %s10
      %p135 = scmp.lt.s32.totalorder %s10, 3
      %p136 = pnand %p134, %p135
      %p137 = pneg %p136
      // Predicated region
      $region9: #{tpu_custom_call.1} parent=5 // pred_check
        _
      $region10: #{tpu_custom_call.1} parent=5 // pred_check_branch
        %139 = sbr.rel (%p136) target = $region12
      $region11: #{tpu_custom_call.1} parent=5 // pred_region
        %s140 = ssub.s32 %s10, 1
        // Predicated region
        $region13: #{tpu_custom_call.1} parent=11 // pred_check
          %p141 = pneg %p74
        $region14: #{tpu_custom_call.1} parent=11 // pred_check_branch
          %143 = sbr.rel (%p141) target = $region16
        $region15: #{tpu_custom_call.1} parent=11 // pred_region
          %s144 = smul.u32 2, %s20
          %s146 = ssub.s32 1024, 1024
          %147 = vsyncadd [#allocation6], %s146
          %s148 = smul.addr %s144, 128
          %s149 = scalar_lea.hbm %s1, %s148
          %s150 = sshll.u32 [#allocation5], 4
          %s151 = int_to_ptr.vmem [resolvable:$true] %s150
          %156 = dma.hbm_to_vmem [thread:$0]  %s149, 1024, %s151, [#allocation6], 256, 256, 16
        $region16: #{tpu_custom_call.1} parent=11 // pred_fallthru
          _
      $region12: #{tpu_custom_call.1} parent=5 // pred_fallthru
        _
      %p157 = scmp.lt.s32.totalorder %s10, 2
      // Predicated region
      $region17: #{tpu_custom_call.1} parent=5 // pred_check
        %p158 = pneg %p157
      $region18: #{tpu_custom_call.1} parent=5 // pred_check_branch
        %160 = sbr.rel (%p158) target = $region20
      $region19: #{tpu_custom_call.1} parent=5 // pred_region
        // Predicated region
        $region21: #{tpu_custom_call.1} parent=19 // pred_check
          %p161 = pneg %p42
        $region22: #{tpu_custom_call.1} parent=19 // pred_check_branch
          %163 = sbr.rel (%p161) target = $region24
        $region23: #{tpu_custom_call.1} parent=19 // pred_region
          %p164 = scmp.lt.s32.totalorder %s17, 1
          %s165 = scalar_select %p164, %s17, 1
          %s166 = smul.addr %s165, 8
          %s167 = scalar_lea.vmem %s0, %s166
        $region24: #{tpu_custom_call.1} parent=19 // pred_fallthru
          _
        // Predicated region
        $region25: #{tpu_custom_call.1} parent=19 // pred_check
          %p168 = pneg %p94
        $region26: #{tpu_custom_call.1} parent=19 // pred_check_branch
          %170 = sbr.rel (%p168) target = $region28
        $region27: #{tpu_custom_call.1} parent=19 // pred_region
          %p171 = scmp.lt.s32.totalorder %s17, 1
          %s172 = scalar_select %p171, %s17, 1
          %s173 = smul.addr %s172, 8
          %s174 = scalar_lea.vmem %s2, %s173
        $region28: #{tpu_custom_call.1} parent=19 // pred_fallthru
          _
      $region20: #{tpu_custom_call.1} parent=5 // pred_fallthru
        _
      %p175 = scmp.le.s32.totalorder 1, %s10
      %p176 = scmp.lt.s32.totalorder %s10, 3
      %p177 = pnand %p175, %p176
      %p178 = pneg %p177
      // Predicated region
      $region29: #{tpu_custom_call.1} parent=5 // pred_check
        _
      $region30: #{tpu_custom_call.1} parent=5 // pred_check_branch
        %180 = sbr.rel (%p177) target = $region32
      $region31: #{tpu_custom_call.1} parent=5 // pred_region
        %s181 = ssub.s32 %s10, 1
        // Predicated region
        $region33: #{tpu_custom_call.1} parent=31 // pred_check
          %p182 = pneg %p74
        $region34: #{tpu_custom_call.1} parent=31 // pred_check_branch
          %184 = sbr.rel (%p182) target = $region36
        $region35: #{tpu_custom_call.1} parent=31 // pred_region
          %185 = dma.done [#allocation6], 1024
        $region36: #{tpu_custom_call.1} parent=31 // pred_fallthru
          _
        %p186 = scmp.lt.s32.totalorder %s19, 1
        %s187 = scalar_select %p186, %s19, 1
        %s188 = smul.addr %s187, 8
        %s189 = scalar_lea.vmem %s0, %s188
        %p190 = pneg %p48
        %p191 = pneg %p45
        %p192 = pneg %p74
        %p193 = pneg %p71
        %p194 = scmp.lt.s32.totalorder %s19, 1
        %s195 = scalar_select %p194, %s19, 1
        %s196 = smul.addr %s195, 8
        %s197 = scalar_lea.vmem %s2, %s196
        %p198 = pneg %p100
        %p199 = pneg %p97
        %p200 = pneg %p126
        %p201 = pneg %p123
        %p202 = scmp.lt.s32.totalorder %s19, 1
        %s203 = scalar_select %p202, %s19, 1
        %s204 = smul.addr %s203, 8
        %s205 = scalar_lea.vmem %s3, %s204
        %p206 = scmp.lt.s32.totalorder %s19, 1
        %s207 = scalar_select %p206, %s19, 1
        %s208 = smul.addr %s207, 8
        %s209 = scalar_lea.vmem %s0, %s208
        %s210 = smul.u32 2, %s20
        %p211 = scmp.lt.s32.totalorder %s19, 1
        %s212 = scalar_select %p211, %s19, 1
        %s213 = smul.addr %s212, 8
        %s214 = scalar_lea.vmem %s2, %s213
        %p215 = scmp.lt.s32.totalorder %s19, 1
        %s216 = scalar_select %p215, %s19, 1
        %s217 = smul.addr %s216, 8
        %s218 = scalar_lea.vmem %s3, %s217
        %p219 = scmp.eq.s32.totalorder %s20, 0
        // Predicated region
        $region37: #{tpu_custom_call.1} parent=31 // pred_check
          %p220 = pneg %p219
        $region38: #{tpu_custom_call.1} parent=31 // pred_check_branch
          %222 = sbr.rel (%p220) target = $region40
        $region39: #{tpu_custom_call.1} parent=31 // pred_region
          %223 = vst [vmem:[#allocation2] sm:$0xff] -1e+30
          %224 = vst [vmem:[#allocation3] sm:$0xff] 0.0
          %225 = vst [vmem:[#allocation4] sm:$0xff] 0.0
        $region40: #{tpu_custom_call.1} parent=31 // pred_fallthru
          _
        %v226 = vld [vmem:[%s209] sm:$0xff]
        %v227 = vld [vmem:[#allocation5] sm:$0xff]
        %v228 = vld [vmem:[#allocation5 + $0x8] sm:$0xff]
        %v229 = vld [vmem:[#allocation5 + $0x10] sm:$0xff]
        %v230 = vld [vmem:[#allocation5 + $0x18] sm:$0xff]
        %v231 = vld [vmem:[#allocation5 + $0x20] sm:$0xff]
        %v232 = vld [vmem:[#allocation5 + $0x28] sm:$0xff]
        %v233 = vld [vmem:[#allocation5 + $0x30] sm:$0xff]
        %v234 = vld [vmem:[#allocation5 + $0x38] sm:$0xff]
        %vm235 = vcmask 261120
        %v237 = vsel %vm235, %v226, 0
        %239 = vmatprep.subr.mxu0 %v228
        %240 = vmatpush1.msra.mxu0 %v227
        %241 = vmatprep.subr.mxu0 %v230
        %242 = vmatpush1.msra.mxu0 %v229
        %243 = vmatprep.subr.mxu0 %v232
        %244 = vmatpush1.msra.mxu0 %v231
        %245 = vmatprep.subr.mxu0 %v234
        %246 = vmatpush1.msra.mxu0 %v233
        %247 = vmatprep.subr.mxu0 0.0
        %248 = vmatpush1.msra.mxu0 0.0
        %249 = vmatprep.subr.mxu0 0.0
        %250 = vmatpush1.msra.mxu0 0.0
        %251 = vmatprep.subr.mxu0 0.0
        %252 = vmatpush1.msra.mxu0 0.0
        %253 = vmatprep.subr.mxu0 0.0
        %254 = vmatpush1.msra.mxu0 0.0
        %255 = vmatprep.subr.mxu0 0.0
        %256 = vmatpush1.msra.mxu0 0.0
        %257 = vmatprep.subr.mxu0 0.0
        %258 = vmatpush1.msra.mxu0 0.0
        %259 = vmatprep.subr.mxu0 0.0
        %260 = vmatpush1.msra.mxu0 0.0
        %261 = vmatprep.subr.mxu0 0.0
        %262 = vmatpush1.msra.mxu0 0.0
        %263 = vmatprep.subr.mxu0 0.0
        %264 = vmatpush1.msra.mxu0 0.0
        %265 = vmatprep.subr.mxu0 0.0
        %266 = vmatpush1.msra.mxu0 0.0
        %267 = vmatprep.subr.mxu0 0.0
        %268 = vmatpush1.msra.mxu0 0.0
        %269 = vmatprep.subr.mxu0 0.0
        %270 = vmatpush1.msra.mxu0 0.0
        %271 = vmatprep.subr.mxu0 0.0
        %272 = vmatpush1.msra.mxu0 0.0
        %273 = vmatprep.subr.mxu0 0.0
        %274 = vmatpush1.msra.mxu0 0.0
        %275 = vmatprep.subr.mxu0 0.0
        %276 = vmatpush1.msra.mxu0 0.0
        %277 = vmatprep.subr.mxu0 0.0
        %278 = vmatpush1.msra.mxu0 0.0
        %279 = vmatprep.subr.mxu0 0.0
        %280 = vmatpush1.msra.mxu0 0.0
        %281 = vmatprep.subr.mxu0 0.0
        %282 = vmatpush1.msra.mxu0 0.0
        %283 = vmatprep.subr.mxu0 0.0
        %284 = vmatpush1.msra.mxu0 0.0
        %285 = vmatprep.subr.mxu0 0.0
        %286 = vmatpush1.msra.mxu0 0.0
        %287 = vmatprep.subr.mxu0 0.0
        %288 = vmatpush1.msra.mxu0 0.0
        %289 = vmatprep.subr.mxu0 0.0
        %290 = vmatpush1.msra.mxu0 0.0
        %291 = vmatprep.subr.mxu0 0.0
        %292 = vmatpush1.msra.mxu0 0.0
        %293 = vmatprep.subr.mxu0 0.0
        %294 = vmatpush1.msra.mxu0 0.0
        %295 = vmatprep.subr.mxu0 0.0
        %296 = vmatpush1.msra.mxu0 0.0
        %297 = vmatprep.subr.mxu0 0.0
        %298 = vmatpush1.msra.mxu0 0.0
        %299 = vmatprep.subr.mxu0 0.0
        %300 = vmatpush1.msra.mxu0 0.0
        %301 = vmatprep.subr.mxu0 0.0
        %302 = vmatpush1.msra.mxu0 0.0
        %303 = vmatprep.mubr.f32.mxu0 0.0
        %304 = vmatmul.mubr.f32.gmra.mrb[0].mxu0 %v237
        %v305 = vpop.f32.mrb[0].mxu0
        %v306 = vadd.f32 0.0, %v305
        %v307 = vpop.f32.mrb[0].mxu0
        %v308 = vadd.f32 0.0, %v307
        %309 = vdwg.mxu0
        %v310 = vlaneseq
        %v311 = vand.u32 %v310, 127
        %v312 = vld [vmem:[%s214] sm:$0xff]
        %s313 = smul.u32 %s20, 256
        %v314 = vstv %s313
        %v315 = vsub.s32 %v312, %v314
        %v316 = vld [vmem:[#allocation2] sm:$0xff]
        %v317 = vmax.f32 %v316, %v306
        %v318 = vmax.f32 %v317, %v308
        %v319 = vld [vmem:[#allocation3] sm:$0xff]
        %v320 = vsub.f32 %v316, %v318
        %v321 = vmul.f32 %v320, 1.442695
        %v322 = vpow.pop %v321
        %v323 = vmul.f32 %v319, %v322
        %v324 = vld [vmem:[#allocation4] sm:$0xff]
        %v325 = vsub.f32 %v306, %v318
        %v326 = vmul.f32 %v325, 1.442695
        %v327 = vpow.pop %v326
        %v328 = vadd.f32 %v323, %v327
        %329 = vset.pattern.permute.xlu0 0
        %330 = vperm.xlu0 %329, %v315
        %v331 = vpop.permute.xlu0 %330
        %vm332 = vcmp.eq.s32.totalorder %v311, %v331
        %v333 = vsel %vm332, %v306, 0.0
        %v334 = vadd.f32 %v324, %v333
        %v335 = vsub.f32 %v308, %v318
        %v336 = vmul.f32 %v335, 1.442695
        %v337 = vpow.pop %v336
        %v338 = vadd.f32 %v328, %v337
        %v339 = vsub.s32 %v315, 128
        %340 = vset.pattern.permute.xlu0 0
        %341 = vperm.xlu0 %340, %v339
        %v342 = vpop.permute.xlu0 %341
        %vm343 = vcmp.eq.s32.totalorder %v311, %v342
        %v344 = vsel %vm343, %v308, 0.0
        %v345 = vadd.f32 %v334, %v344
        %346 = vst [vmem:[#allocation2] sm:$0xff] %v318
        %347 = vst [vmem:[#allocation3] sm:$0xff] %v338
        %348 = vst [vmem:[#allocation4] sm:$0xff] %v345
        // Predicated region
        $region41: #{tpu_custom_call.1} parent=31 // pred_check
          %p349 = pneg %p219
        $region42: #{tpu_custom_call.1} parent=31 // pred_check_branch
          %351 = sbr.rel (%p349) target = $region44
        $region43: #{tpu_custom_call.1} parent=31 // pred_region
          %v352 = vld [vmem:[#allocation2] sm:$0xff]
          %353 = vmax.xlane.f32.xlu0 %v352
          %v354 = vpop.xlane.xlu0 %353
          %v355 = vld [vmem:[#allocation3] sm:$0xff]
          %v356 = vsub.f32 %v352, %v354
          %v357 = vmul.f32 %v356, 1.442695
          %v358 = vpow.pop %v357
          %v359 = vmul.f32 %v355, %v358
          %360 = vadd.xlane.f32.xlu0 %v359
          %v361 = vpop.xlane.xlu0 %360
          %v362 = vlog2.pop %v361
          %v363 = vmul.f32 %v362, 0.6931472
          %v364 = vadd.f32 %v354, %v363
          %v365 = vld [vmem:[#allocation4] sm:$0xff]
          %366 = vadd.xlane.f32.xlu0 %v365
          %v367 = vpop.xlane.xlu0 %366
          %v368 = vld [vmem:[%s214] sm:$0xff]
          %vm369 = vcmp.ne.s32.totalorder %v368, 4294967196
          %v370 = vsub.f32 %v364, %v367
          %v371 = vsel %vm369, %v370, 0.0
          %vm372 = vcmask 7168
          %373 = vst.msk [vmem:[%s218] sm:$0xff] %vm372, %v371
        $region44: #{tpu_custom_call.1} parent=31 // pred_fallthru
          _
        %p374 = scmp.lt.s32.totalorder %s19, 1
        %s375 = scalar_select %p374, %s19, 1
        %s376 = smul.addr %s375, 8
        %s377 = scalar_lea.vmem %s3, %s376
        // Predicated region
        $region45: #{tpu_custom_call.1} parent=31 // pred_check
          %p378 = pneg %p123
        $region46: #{tpu_custom_call.1} parent=31 // pred_check_branch
          %380 = sbr.rel (%p378) target = $region48
        $region47: #{tpu_custom_call.1} parent=31 // pred_region
          _
        $region48: #{tpu_custom_call.1} parent=31 // pred_fallthru
          _
      $region32: #{tpu_custom_call.1} parent=5 // pred_fallthru
        _
      %p381 = scmp.le.s32.totalorder 2, %s10
      // Predicated region
      $region49: #{tpu_custom_call.1} parent=5 // pred_check
        %p382 = pneg %p381
      $region50: #{tpu_custom_call.1} parent=5 // pred_check_branch
        %384 = sbr.rel (%p382) target = $region52
      $region51: #{tpu_custom_call.1} parent=5 // pred_region
        %s385 = ssub.s32 %s10, 2
        // Predicated region
        $region53: #{tpu_custom_call.1} parent=51 // pred_check
          %p386 = pneg %p129
        $region54: #{tpu_custom_call.1} parent=51 // pred_check_branch
          %388 = sbr.rel (%p386) target = $region56
        $region55: #{tpu_custom_call.1} parent=51 // pred_region
          %p389 = scmp.lt.s32.totalorder %s21, 1
          %s390 = scalar_select %p389, %s21, 1
          %s391 = smul.addr %s390, 8
          %s392 = scalar_lea.vmem %s3, %s391
        $region56: #{tpu_custom_call.1} parent=51 // pred_fallthru
          _
      $region52: #{tpu_custom_call.1} parent=5 // pred_fallthru
        _
    $region6: #{tpu_custom_call.1} parent=1 // loop_footer
      %s14 = sadd.s32 1, %s10
    $region7: #{tpu_custom_call.1} parent=1 // loop_footer_branch
      %9 = sbr.rel target = $region3
    $region8: #{tpu_custom_call.1} parent=1 // loop_exit
      _
    %393 = vsyncpa [#allocation6], 1
    %s394 = scalar_lea.sflag [#allocation6], 1
    %395 = vsyncpa %s394, 1

</llo_original>
